<compile_context>
chip_gen: v7x
topology: tpu7x:2x2x1
jax: 0.10.0
libtpu: 0.0.40
codegen_flags: <defaults>
</compile_context>

<pallas_src>
import functools
import math

import jax
import jax.numpy as jnp
from jax.experimental import pallas as pl
from jax.experimental.pallas import tpu as pltpu


# ---------------------------------------------------------------------------
# Tile-size helpers
# ---------------------------------------------------------------------------
def _pick_n_tile(n, pref=512):
    """Lane-axis tile: `pref` (multiple of 128) if it divides n, else a smaller
    multiple of 128, else the full dim (always legal)."""
    if n <= pref:
        return n
    for cand in range(pref, 127, -128):
        if n % cand == 0:
            return cand
    return n


def _pick_k_tile(k, pref=1024):
    """Reduction tile must divide K exactly (no garbage in the accumulation)."""
    if k <= pref:
        return k
    for cand in range(pref, 127, -128):
        if k % cand == 0:
            return cand
    return k


def _group_factor(m, c):
    """View (M, C) as (M/g, C*g) so the lane axis is 128-wide for C<128."""
    if c >= 128 or 128 % c != 0:
        return 1
    g = 128 // c
    return g if m % g == 0 else 1


def _rows(x):
    return math.prod(x.shape[:-1])


# ---------------------------------------------------------------------------
# Pallas kernel 1: tiled MXU matmul (bf16 in, f32 accumulate,
#                  optional fused bias and fused BN sum/sumsq partials)
# ---------------------------------------------------------------------------
def _matmul_kernel(*refs, add_bias, compute_stats, m_total, tm):
    it = iter(refs)
    a_ref = next(it)
    b_ref = next(it)
    bias_ref = next(it) if add_bias else None
    o_ref = next(it)
    stats_ref = next(it) if compute_stats else None
    acc_ref = next(it)

    k = pl.program_id(2)

    @pl.when(k == 0)
    def _():
        acc_ref[...] = jnp.zeros_like(acc_ref)

    acc_ref[...] += jnp.dot(a_ref[...], b_ref[...],
                            preferred_element_type=jnp.float32)

    @pl.when(k == pl.num_programs(2) - 1)
    def _():
        r = acc_ref[...]
        if add_bias:
            r = r + bias_ref[...]
        o_ref[...] = r.astype(o_ref.dtype)
        if compute_stats:
            rv = r
            if m_total % tm != 0:          # mask padded boundary rows only if any
                i = pl.program_id(0)
                rows = jax.lax.broadcasted_iota(jnp.int32, r.shape, 0) + i * tm
                rv = jnp.where(rows < m_total, r, 0.0)
            s = jnp.sum(rv, axis=0, keepdims=True)
            ss = jnp.sum(rv * rv, axis=0, keepdims=True)
            stats_ref[...] = jnp.concatenate([s, ss], axis=0)   # (2, tn) partial


def pallas_matmul(a, b, bias=None, want_stats=False, out_dtype=jnp.bfloat16,
                  tm=512, tn=512, tk=1024):
    """(M,K) @ (K,N); bf16 operands feed the MXU, f32 accumulation.
    Returns (out, stats) where stats is (2*num_m_tiles, N) f32 partial
    sum / sum-of-squares (or None)."""
    M, K = a.shape
    K2, N = b.shape
    assert K == K2
    a = a.astype(jnp.bfloat16)
    b = b.astype(jnp.bfloat16)
    tm_e = tm if M >= tm else M
    tn_e = _pick_n_tile(N, tn)
    tk_e = _pick_k_tile(K, tk)
    assert K % tk_e == 0
    gm = pl.cdiv(M, tm_e)
    grid = (gm, pl.cdiv(N, tn_e), K // tk_e)

    in_specs = [pl.BlockSpec((tm_e, tk_e), lambda i, j, k: (i, k)),
                pl.BlockSpec((tk_e, tn_e), lambda i, j, k: (k, j))]
    operands = [a, b]
    if bias is not None:
        in_specs.append(pl.BlockSpec((1, tn_e), lambda i, j, k: (0, j)))
        operands.append(bias.reshape(1, N).astype(jnp.float32))

    out_shapes = [jax.ShapeDtypeStruct((M, N), out_dtype)]
    out_specs = [pl.BlockSpec((tm_e, tn_e), lambda i, j, k: (i, j))]
    if want_stats:
        out_shapes.append(jax.ShapeDtypeStruct((2 * gm, N), jnp.float32))
        out_specs.append(pl.BlockSpec((2, tn_e), lambda i, j, k: (i, j)))

    outs = pl.pallas_call(
        functools.partial(_matmul_kernel, add_bias=bias is not None,
                          compute_stats=want_stats, m_total=M, tm=tm_e),
        out_shape=tuple(out_shapes) if want_stats else out_shapes[0],
        grid=grid,
        in_specs=in_specs,
        out_specs=out_specs if want_stats else out_specs[0],
        scratch_shapes=[pltpu.VMEM((tm_e, tn_e), jnp.float32)],
        compiler_params=pltpu.CompilerParams(
            dimension_semantics=("parallel", "parallel", "arbitrary"),
            vmem_limit_bytes=32 * 1024 * 1024),
    )(*operands)
    if want_stats:
        return outs[0], outs[1]
    return outs, None


def bn_from_stats(stats, m_rows, gamma, beta, eps=1e-5):
    """Training-mode BN from fused matmul partials -> per-channel scale/shift."""
    C = stats.shape[-1]
    sums = stats.reshape(-1, 2, C).sum(axis=0)
    mean = sums[0] / m_rows
    var = jnp.maximum(sums[1] / m_rows - mean * mean, 0.0)  # biased var, as PyTorch BN
    scale = gamma / jnp.sqrt(var + eps)
    shift = beta - mean * scale
    return scale, shift


# ---------------------------------------------------------------------------
# Pallas kernel 2: tiled per-channel affine (+ optional ReLU)
# ---------------------------------------------------------------------------
def _affine_kernel(x_ref, s_ref, b_ref, o_ref, *, relu):
    y = x_ref[...].astype(jnp.float32) * s_ref[...] + b_ref[...]
    if relu:
        y = jnp.maximum(y, 0.0)
    o_ref[...] = y.astype(o_ref.dtype)


def pallas_affine(x, scale, shift, relu):
    shp = x.shape
    C = shp[-1]
    x2 = x.reshape(-1, C)
    M = x2.shape[0]
    g = _group_factor(M, C)
    Mg, Cg = M // g, C * g
    sg = jnp.tile(scale.astype(jnp.float32), g).reshape(1, Cg)
    bg = jnp.tile(shift.astype(jnp.float32), g).reshape(1, Cg)
    tm = 1024 if Mg >= 1024 else Mg
    out = pl.pallas_call(
        functools.partial(_affine_kernel, relu=relu),
        out_shape=jax.ShapeDtypeStruct((Mg, Cg), jnp.bfloat16),
        grid=(pl.cdiv(Mg, tm),),
        in_specs=[pl.BlockSpec((tm, Cg), lambda i: (i, 0)),
                  pl.BlockSpec((1, Cg), lambda i: (0, 0)),
                  pl.BlockSpec((1, Cg), lambda i: (0, 0))],
        out_specs=pl.BlockSpec((tm, Cg), lambda i: (i, 0)),
        compiler_params=pltpu.CompilerParams(
            dimension_semantics=("parallel",)),
    )(x2.reshape(Mg, Cg), sg, bg)
    return out.reshape(shp)


# ---------------------------------------------------------------------------
# Pallas kernel 3: fused  bnA(fx), bnB(res), relu(res+fx), policy blend
#   out = relu(bnB(res) + bnA(fx)) * p0 + bnB(res) * p1
#   (policy scalars p0/p1 live in SMEM)
# ---------------------------------------------------------------------------
def _blend_kernel(p_ref, fx_ref, res_ref, sa_ref, ba_ref, sb_ref, bb_ref, o_ref):
    p0 = p_ref[0]
    p1 = p_ref[1]
    fx = fx_ref[...].astype(jnp.float32) * sa_ref[...] + ba_ref[...]
    rs = res_ref[...].astype(jnp.float32) * sb_ref[...] + bb_ref[...]
    y = jnp.maximum(rs + fx, 0.0)
    o_ref[...] = (y * p0 + rs * p1).astype(o_ref.dtype)


def pallas_residual_blend(fx, res, sa, ba, sb, bb, p):
    shp = fx.shape
    C = shp[-1]
    fx2 = fx.reshape(-1, C)
    res2 = res.reshape(-1, C)
    M = fx2.shape[0]
    g = _group_factor(M, C)
    Mg, Cg = M // g, C * g

    def vec(v):
        return jnp.tile(v.astype(jnp.float32), g).reshape(1, Cg)

    tm = 1024 if Mg >= 1024 else Mg
    data_spec = pl.BlockSpec((tm, Cg), lambda i: (i, 0))
    vec_spec = pl.BlockSpec((1, Cg), lambda i: (0, 0))
    smem_spec = pl.BlockSpec(memory_space=pltpu.MemorySpace.SMEM)
    out = pl.pallas_call(
        _blend_kernel,
        out_shape=jax.ShapeDtypeStruct((Mg, Cg), jnp.bfloat16),
        grid=(pl.cdiv(Mg, tm),),
        in_specs=[smem_spec, data_spec, data_spec] + [vec_spec] * 4,
        out_specs=pl.BlockSpec((tm, Cg), lambda i: (i, 0)),
        compiler_params=pltpu.CompilerParams(
            dimension_semantics=("parallel",)),
    )(p.astype(jnp.float32), fx2.reshape(Mg, Cg), res2.reshape(Mg, Cg),
      vec(sa), vec(ba), vec(sb), vec(bb))
    return out.reshape(shp)


# ---------------------------------------------------------------------------
# Pallas kernel 4: adaptive average pool (1,1,1) as split-partial reduction
#   grid = (splits [parallel], row tiles [arbitrary]); per-split partials are
#   reduced in JAX, so both v7x TensorCores get work and no accumulator races.
# ---------------------------------------------------------------------------
def _avgpool_kernel(x_ref, o_ref, *, sp, ts, need_mask):
    t = pl.program_id(1)

    @pl.when(t == 0)
    def _():
        o_ref[...] = jnp.zeros_like(o_ref)

    x = x_ref[...].astype(jnp.float32)          # (N, 1, ts, C)
    if need_mask:
        rows = jax.lax.broadcasted_iota(jnp.int32, x.shape, 2) + t * ts
        x = jnp.where(rows < sp, x, 0.0)
    v = jnp.sum(x[:, 0], axis=1)                # (N, C)
    o_ref[...] += v[None]                       # (1, N, C)


def pallas_avgpool(x):
    """AdaptiveAvgPool3d((1,1,1)) + flatten: (N,D,H,W,C) -> (N,C) f32."""
    N, D, H, W, C = x.shape
    S = D * H * W
    n_splits = 2 if (S % 2 == 0 and S >= 2) else 1
    sp = S // n_splits
    x4 = x.reshape(N, n_splits, sp, C)
    ts = sp if sp <= 1024 else 1024
    n_tiles = pl.cdiv(sp, ts)
    partials = pl.pallas_call(
        functools.partial(_avgpool_kernel, sp=sp, ts=ts,
                          need_mask=(sp % ts != 0)),
        out_shape=jax.ShapeDtypeStruct((n_splits, N, C), jnp.float32),
        grid=(n_splits, n_tiles),
        in_specs=[pl.BlockSpec((N, 1, ts, C), lambda s, t: (0, s, t, 0))],
        out_specs=pl.BlockSpec((1, N, C), lambda s, t: (s, 0, 0)),
        compiler_params=pltpu.CompilerParams(
            dimension_semantics=("parallel", "arbitrary")),
    )(x4)
    return partials.sum(axis=0) * (1.0 / S)


# ---------------------------------------------------------------------------
# Layer helpers (im2col conv, maxpool)
# ---------------------------------------------------------------------------
def conv3d(x, w, stride, padding, dilation, want_stats=False):
    """x: (N,D,H,W,Cin) bf16, w: (kd,kh,kw,Cin,Cout) bf16 -> (bf16 out, stats)."""
    N, D, H, W, Cin = x.shape
    kd, kh, kw, _, Cout = w.shape

    def osz(L, k):
        return (L + 2 * padding - dilation * (k - 1) - 1) // stride + 1

    Do, Ho, Wo = osz(D, kd), osz(H, kh), osz(W, kw)
    if padding > 0:
        x = jnp.pad(x, ((0, 0), (padding, padding), (padding, padding),
                        (padding, padding), (0, 0)))
    if kd == kh == kw == 1 and stride == 1:
        a_mat = x.reshape(N * Do * Ho * Wo, Cin)   # pure view, no copy
    else:
        # TODO(synk): replace this materialized im2col with an in-kernel
        # tap-accumulated conv (manual DMA over the padded NDHWC input).
        cols = []
        for a_ in range(kd):
            for b_ in range(kh):
                for c_ in range(kw):
                    cols.append(
                        x[:,
                          a_ * dilation: a_ * dilation + stride * (Do - 1) + 1: stride,
                          b_ * dilation: b_ * dilation + stride * (Ho - 1) + 1: stride,
                          c_ * dilation: c_ * dilation + stride * (Wo - 1) + 1: stride,
                          :])
        # Cin stays innermost (lane axis) so A tiles are contiguous 128-lane loads.
        a_mat = jnp.concatenate(cols, axis=-1).reshape(
            N * Do * Ho * Wo, kd * kh * kw * Cin)
    b_mat = w.reshape(kd * kh * kw * Cin, Cout)
    out, stats = pallas_matmul(a_mat, b_mat, want_stats=want_stats,
                               out_dtype=jnp.bfloat16)
    return out.reshape(N, Do, Ho, Wo, Cout), stats


def maxpool3d(x, k=3, s=2, p=1):
    """MaxPool3d(kernel=3, stride=2, padding=1, ceil_mode=True)."""
    N, D, H, W, C = x.shape

    def osz(L):
        o = -(-(L + 2 * p - k) // s) + 1
        if (o - 1) * s >= L + p:
            o -= 1
        return o

    Do, Ho, Wo = osz(D), osz(H), osz(W)

    def rpad(L, O):
        return max(0, (O - 1) * s + k - L - p)

    xp = jnp.pad(x, ((0, 0), (p, rpad(D, Do)), (p, rpad(H, Ho)),
                     (p, rpad(W, Wo)), (0, 0)),
                 constant_values=-jnp.inf)
    out = None
    for a in range(k):
        for b in range(k):
            for c in range(k):
                v = xp[:, a: a + s * (Do - 1) + 1: s,
                          b: b + s * (Ho - 1) + 1: s,
                          c: c + s * (Wo - 1) + 1: s, :]
                out = v if out is None else jnp.maximum(out, v)
    return out


# ---------------------------------------------------------------------------
# Deeplab_ResNet_Backbone forward (BasicBlock; residual+policy handled here)
# ---------------------------------------------------------------------------
def stem_forward(params, img):
    """Policy-independent stem: conv1 -> bn1+relu -> maxpool (computed once)."""
    x = img.astype(jnp.bfloat16)
    x, st = conv3d(x, params['conv1_w'], stride=2, padding=3, dilation=1,
                   want_stats=True)
    s, b = bn_from_stats(st, _rows(x), *params['bn1'])
    x = pallas_affine(x, s, b, relu=True)
    return maxpool3d(x, k=3, s=2, p=1)


def basic_block_raw(x, blk):
    """conv1 -> bn1+relu -> conv2; returns raw conv2 output + bn2 scale/shift."""
    out1, st1 = conv3d(x, blk['conv1_w'], stride=blk['stride'],
                       padding=blk['dilation'], dilation=blk['dilation'],
                       want_stats=True)
    s1, b1 = bn_from_stats(st1, _rows(out1), *blk['bn1'])
    h = pallas_affine(out1, s1, b1, relu=True)
    out2, st2 = conv3d(h, blk['conv2_w'], stride=1,
                       padding=blk['dilation'], dilation=blk['dilation'],
                       want_stats=True)
    s2, b2 = bn_from_stats(st2, _rows(out2), *blk['bn2'])
    return out2, s2, b2


def blocks_forward(params, x, policy=None):
    """Residual blocks (policy blended) + avgpool; starts from the stem output."""
    t = 0
    for seg in range(len(params['layers'])):
        for bidx, blk in enumerate(params['blocks'][seg]):
            if bidx == 0 and params['ds'][seg] is not None:
                ds = params['ds'][seg]
                res, st = conv3d(x, ds['w'], stride=ds['stride'],
                                 padding=0, dilation=1, want_stats=True)
                sB, bB = bn_from_stats(st, _rows(res), *ds['bn'])
            else:
                res = x
                C = x.shape[-1]
                sB = jnp.ones((C,), jnp.float32)
                bB = jnp.zeros((C,), jnp.float32)
            fx, sA, bA = basic_block_raw(x, blk)
            if policy is None:
                p = jnp.array([1.0, 0.0], jnp.float32)   # relu(residual + fx)
            else:
                p = policy[t].astype(jnp.float32)        # 2-D policy semantics
            x = pallas_residual_blend(fx, res, sA, bA, sB, bB, p)
            t += 1
    return pallas_avgpool(x)    # (N, 512*expansion) f32


# ---------------------------------------------------------------------------
# MTL forward
# ---------------------------------------------------------------------------
def gumbel_softmax(logits, tau, hard, key):
    g = -jnp.log(-jnp.log(jax.random.uniform(key, logits.shape) + 1e-20) + 1e-20)
    y = jax.nn.softmax((logits + g) / tau, axis=-1)
    if hard:
        y = jax.nn.one_hot(jnp.argmax(y, axis=-1), y.shape[-1], dtype=y.dtype)
    return y


def mtl_forward(params, img, temperature, is_policy, num_train_layers=None,
                hard_sampling=False, mode='train', policys=None, rng=None):
    layers = params['layers']
    skip_layer = params['skip_layer']
    num_tasks = len(params['fc'])
    total = sum(layers)
    if num_train_layers is None:
        num_train_layers = total - skip_layer
    num_train_layers = min(total - skip_layer, num_train_layers)

    # Policy-independent stem computed ONCE and shared by every task.
    x_stem = stem_forward(params, img)

    if is_policy:
        if mode == 'train':
            assert rng is not None
            keys = jax.random.split(rng, num_tasks)
            policys = [gumbel_softmax(params['task_logits'][t], temperature,
                                      hard_sampling, keys[t])
                       for t in range(num_tasks)]
        elif mode == 'fix_policy':
            assert policys is not None and all(p is not None for p in policys)
        elif mode == 'eval':
            # TODO(synk): numpy-RNG test_sample_policy not reproduced.
            raise NotImplementedError('eval-mode policy sampling not implemented')
        else:
            raise NotImplementedError('mode %s is not implemented' % mode)

        skip = total - num_train_layers
        padding = jnp.ones((skip, 2), jnp.float32)
        if skip > 0:
            padding = padding.at[:, 1].set(0.0)
        feats = []
        # TODO(synk): per-task passes share all weights but differ in BN batch
        # statistics, so cross-task M-axis batching would change semantics.
        for t in range(num_tasks):
            padded_policy = jnp.concatenate(
                [padding, policys[t][-num_train_layers:].astype(jnp.float32)],
                axis=0)
            feats.append(blocks_forward(params, x_stem, padded_policy))
    else:
        f = blocks_forward(params, x_stem, None)
        feats = [f] * num_tasks
        policys = [None] * num_tasks

    # Fused FC heads: one matmul for all tasks (stack feats on M, concat W on N,
    # take the per-task diagonal blocks).
    nc = [params['fc'][t]['w'].shape[1] for t in range(num_tasks)]
    w_all = jnp.concatenate([params['fc'][t]['w'] for t in range(num_tasks)],
                            axis=1)
    b_all = jnp.concatenate([params['fc'][t]['b'] for t in range(num_tasks)],
                            axis=0)
    feat_all = jnp.concatenate(feats, axis=0)
    out_all, _ = pallas_matmul(feat_all, w_all, bias=b_all,
                               out_dtype=jnp.float32)
    n_batch = img.shape[0]
    outputs = []
    off = 0
    for t in range(num_tasks):
        outputs.append(out_all[t * n_batch:(t + 1) * n_batch, off:off + nc[t]])
        off += nc[t]
    return outputs, policys, [None] * num_tasks


# ---------------------------------------------------------------------------
# Deterministic parameter construction (mirrors the PyTorch __init__ shapes)
# ---------------------------------------------------------------------------
def init_mtl_params(key, layers, opt, init_method='equal', init_neg_logits=None):
    expansion = 1   # BasicBlock
    tasks_num_class = opt['task']['tasks_num_class']
    num_tasks = len(tasks_num_class)
    skip_layer = opt['skip_layer']
    keys = iter(jax.random.split(key, 256))

    def conv_init(kd, kh, kw, cin, cout):
        w = 0.01 * jax.random.normal(next(keys), (kd, kh, kw, cin, cout),
                                     jnp.float32)
        return w.astype(jnp.bfloat16)          # weights stored bf16 for the MXU

    p = {'layers': layers, 'skip_layer': skip_layer}
    p['conv1_w'] = conv_init(7, 7, 7, 1, 64)
    p['bn1'] = (jnp.ones(64, jnp.float32), jnp.zeros(64, jnp.float32))

    strides = [1, 2, 1, 1]
    dilations = [1, 1, 2, 4]
    filt_sizes = [64, 128, 256, 512]
    inplanes = 64
    blocks, ds = [], []
    for planes, nb, stride, dil in zip(filt_sizes, layers, strides, dilations):
        if stride != 1 or inplanes != planes * expansion or dil in (2, 4):
            ds.append({'w': conv_init(1, 1, 1, inplanes, planes * expansion),
                       'bn': (jnp.ones(planes * expansion, jnp.float32),
                              jnp.zeros(planes * expansion, jnp.float32)),
                       'stride': stride})
        else:
            ds.append(None)
        seg = []
        for b in range(nb):
            in_ch = inplanes if b == 0 else planes * expansion
            seg.append({'conv1_w': conv_init(3, 3, 3, in_ch, planes),
                        'bn1': (jnp.ones(planes, jnp.float32),
                                jnp.zeros(planes, jnp.float32)),
                        'conv2_w': conv_init(3, 3, 3, planes, planes),
                        'bn2': (jnp.ones(planes, jnp.float32),
                                jnp.zeros(planes, jnp.float32)),
                        'stride': stride if b == 0 else 1,
                        'dilation': dil})
        inplanes = planes * expansion
        blocks.append(seg)
    p['blocks'] = blocks
    p['ds'] = ds

    # task-specific FC heads (Classification_Module assumed Linear)
    p['fc'] = [{'w': (0.01 * jax.random.normal(
                          next(keys), (512 * expansion, nc),
                          jnp.float32)).astype(jnp.bfloat16),
                'b': jnp.zeros((nc,), jnp.float32)}
               for nc in tasks_num_class]

    # reset_logits
    num_layers = sum(layers)
    logits = []
    for _ in range(num_tasks):
        if init_method == 'all_chosen':
            tl = init_neg_logits * jnp.ones((num_layers - skip_layer, 2),
                                            jnp.float32)
            tl = tl.at[:, 0].set(0.0)
        elif init_method == 'random':
            tl = 0.001 * jax.random.normal(next(keys),
                                           (num_layers - skip_layer, 2),
                                           jnp.float32)
        elif init_method == 'equal':
            tl = 0.5 * jnp.ones((num_layers - skip_layer, 2), jnp.float32)
        else:
            raise NotImplementedError(init_method)
        logits.append(tl)
    p['task_logits'] = logits
    return p


if __name__ == "__main__":
    layers = [1, 1, 1, 1]          # small synthetic config, 4 residual blocks
    opt = {'task': {'cat_target': ['sex'], 'num_target': ['age'],
                    'targets': ['sex', 'age'], 'tasks_num_class': [3, 1]},
           'skip_layer': 0}

    params = init_mtl_params(jax.random.PRNGKey(0), layers, opt,
                             init_method='equal')

    # img: PyTorch (N=2, C=1, D=8, H=8, W=8) -> channels-last (2, 8, 8, 8, 1)
    img = jax.random.normal(jax.random.PRNGKey(0), (2, 8, 8, 8, 1), jnp.float32)

    # deterministic fixed policy per task (softmax of the 'equal' logits)
    num_tasks = len(opt['task']['tasks_num_class'])
    policys = [jax.nn.softmax(params['task_logits'][t], axis=-1)
               for t in range(num_tasks)]

    outputs, pols, _ = mtl_forward(params, img, temperature=5.0,
                                   is_policy=True, mode='fix_policy',
                                   policys=policys)
    for o in outputs:
        jax.block_until_ready(o)
    assert outputs[0].shape == (2, 3) and outputs[1].shape == (2, 1)
    print("KERNEL_OK")
</pallas_src>

<mosaic_0001>
module attributes {stable_mosaic.version = 11 : i64} {
  func.func @_matmul_kernel(%arg0: i32, %arg1: i32, %arg2: i32, %arg3: memref<128x343xbf16, #tpu.memory_space<vmem>>, %arg4: memref<343x64xbf16, #tpu.memory_space<vmem>>, %arg5: memref<128x64xbf16, #tpu.memory_space<vmem>>, %arg6: memref<2x64xf32, #tpu.memory_space<vmem>>, %arg7: memref<128x64xf32, #tpu.memory_space<vmem>>) attributes {dimension_semantics = [#tpu.dimension_semantics<parallel>, #tpu.dimension_semantics<parallel>, #tpu.dimension_semantics<arbitrary>], iteration_bounds = array<i64: 1, 1, 1>, scalar_prefetch = 0 : i64, scratch_operands = 1 : i64, tpu.core_type = #tpu.core_type<tc>, window_params = [{transform_indices = @transform_0, window_bounds = array<i64: 128, 343>}, {transform_indices = @transform_1, window_bounds = array<i64: 343, 64>}, {transform_indices = @transform_2, window_bounds = array<i64: 128, 64>}, {transform_indices = @transform_3, window_bounds = array<i64: 2, 64>}]} {
    %c0_i32 = arith.constant 0 : i32
    %0 = arith.cmpi eq, %arg2, %c0_i32 : i32
    %1 = arith.extui %0 : i1 to i32
    %c0_i32_0 = arith.constant 0 : i32
    %2 = arith.cmpi ne, %1, %c0_i32_0 : i32
    scf.if %2 {
      %cst_10 = arith.constant 0.000000e+00 : f32
      %12 = vector.broadcast %cst_10 : f32 to vector<128x64xf32>
      %c0_11 = arith.constant 0 : index
      %c0_12 = arith.constant 0 : index
      %13 = vector.load %arg7[%c0_11, %c0_12] : memref<128x64xf32, #tpu.memory_space<vmem>>, vector<128x64xf32>
      tpu.vector_store %arg7[%c0_11, %c0_12], %12 {strides = array<i32>} : memref<128x64xf32, #tpu.memory_space<vmem>>, vector<128x64xf32>,
    } else {
    }
    %c0 = arith.constant 0 : index
    %c0_1 = arith.constant 0 : index
    %3 = vector.load %arg7[%c0, %c0_1] : memref<128x64xf32, #tpu.memory_space<vmem>>, vector<128x64xf32>
    %c0_2 = arith.constant 0 : index
    %c0_3 = arith.constant 0 : index
    %4 = vector.load %arg3[%c0_2, %c0_3] : memref<128x343xbf16, #tpu.memory_space<vmem>>, vector<128x343xbf16>
    %c0_4 = arith.constant 0 : index
    %c0_5 = arith.constant 0 : index
    %5 = vector.load %arg4[%c0_4, %c0_5] : memref<343x64xbf16, #tpu.memory_space<vmem>>, vector<343x64xbf16>
    %cst = arith.constant dense<0.000000e+00> : vector<128x64xf32>
    %6 = tpu.matmul %4, %5, %cst {dimension_numbers = #tpu.dot_dimension_numbers<[1], [0], [0], [1], [0, 0, 1, 1], [], []>} : vector<128x343xbf16>, vector<343x64xbf16>, vector<128x64xf32> -> vector<128x64xf32>
    %7 = arith.addf %3, %6 : vector<128x64xf32>
    %c0_6 = arith.constant 0 : index
    %c0_7 = arith.constant 0 : index
    %8 = vector.load %arg7[%c0_6, %c0_7] : memref<128x64xf32, #tpu.memory_space<vmem>>, vector<128x64xf32>
    tpu.vector_store %arg7[%c0_6, %c0_7], %7 {strides = array<i32>} : memref<128x64xf32, #tpu.memory_space<vmem>>, vector<128x64xf32>,
    %c0_i32_8 = arith.constant 0 : i32
    %9 = arith.cmpi eq, %arg2, %c0_i32_8 : i32
    %10 = arith.extui %9 : i1 to i32
    %c0_i32_9 = arith.constant 0 : i32
    %11 = arith.cmpi ne, %10, %c0_i32_9 : i32
    scf.if %11 {
      %c0_10 = arith.constant 0 : index
      %c0_11 = arith.constant 0 : index
      %12 = vector.load %arg7[%c0_10, %c0_11] : memref<128x64xf32, #tpu.memory_space<vmem>>, vector<128x64xf32>
      %13 = arith.truncf %12 : vector<128x64xf32> to vector<128x64xbf16>
      %c0_12 = arith.constant 0 : index
      %c0_13 = arith.constant 0 : index
      %14 = vector.load %arg5[%c0_12, %c0_13] : memref<128x64xbf16, #tpu.memory_space<vmem>>, vector<128x64xbf16>
      tpu.vector_store %arg5[%c0_12, %c0_13], %13 {strides = array<i32>} : memref<128x64xbf16, #tpu.memory_space<vmem>>, vector<128x64xbf16>,
      %cst_14 = arith.constant dense<0.000000e+00> : vector<64xf32>
      %15 = vector.multi_reduction <add>, %12, %cst_14 [0] : vector<128x64xf32> to vector<64xf32>
      %16 = vector.shape_cast %15 : vector<64xf32> to vector<1x64xf32>
      %17 = arith.mulf %12, %12 : vector<128x64xf32>
      %cst_15 = arith.constant dense<0.000000e+00> : vector<64xf32>
      %18 = vector.multi_reduction <add>, %17, %cst_15 [0] : vector<128x64xf32> to vector<64xf32>
      %19 = vector.shape_cast %18 : vector<64xf32> to vector<1x64xf32>
      %20 = tpu.concatenate %16, %19 in 0 : vector<1x64xf32>, vector<1x64xf32> -> vector<2x64xf32>
      %c0_16 = arith.constant 0 : index
      %c0_17 = arith.constant 0 : index
      %21 = vector.load %arg6[%c0_16, %c0_17] : memref<2x64xf32, #tpu.memory_space<vmem>>, vector<2x64xf32>
      tpu.vector_store %arg6[%c0_16, %c0_17], %20 {strides = array<i32>} : memref<2x64xf32, #tpu.memory_space<vmem>>, vector<2x64xf32>,
    } else {
    }
    return
  }
  func.func @transform_0(%arg0: i32, %arg1: i32, %arg2: i32) -> (i32, i32) {
    %c0_i32 = arith.constant 0 : i32
    return %arg0, %arg2 : i32, i32
  }
  func.func @transform_1(%arg0: i32, %arg1: i32, %arg2: i32) -> (i32, i32) {
    %c0_i32 = arith.constant 0 : i32
    return %arg2, %arg1 : i32, i32
  }
  func.func @transform_2(%arg0: i32, %arg1: i32, %arg2: i32) -> (i32, i32) {
    %c0_i32 = arith.constant 0 : i32
    return %arg0, %arg1 : i32, i32
  }
  func.func @transform_3(%arg0: i32, %arg1: i32, %arg2: i32) -> (i32, i32) {
    %c0_i32 = arith.constant 0 : i32
    return %arg0, %arg1 : i32, i32
  }
}

</mosaic_0001>

<llo_original>
// kernel: tpu_custom_call.1
$region0: #{tpu_custom_call.1}
  #allocation0 [shape = 'u32[]', space=smem, size = 0x4, offset = 0x4, fixed_abs, tag = 'smem constant byte address 0x4 - core index']
  #allocation1 [shape = 'u32[144,128]{1,0:T(1,128)}', space=vmem, size = 0x12000, scoped, tag = 'internal scratch']
  #allocation2 [shape = 'f32[128,64]{1,0:T(8,128)}', space=vmem, size = 0x10000, scoped, tag = 'scratch operand']
  %s0 = inlined_call_operand.vmem [shape: bf16[128,343], index: 0, kind: input, shape index: {}]
  %s1 = inlined_call_operand.vmem [shape: bf16[343,64], index: 1, kind: input, shape index: {}]
  %s2 = inlined_call_operand.vmem [shape: bf16[128,64], index: 2, kind: output, shape index: {0}]
  %s3 = inlined_call_operand.hbm [shape: f32[2,64], index: 3, kind: output, shape index: {1}]
  %4 = xla_tuple %s2, %s3
  %s5 = sld [smem:[#allocation0]]
  $region34: #{tpu_custom_call.1} parent=0
    _
  %s7 = ssub.s32 1, %s5
  %s8 = scalar_select 0, %s7, %s5
  $region1: #{tpu_custom_call.1} parent=0
    #allocation3 [shape = 'u8[1024]{0}', space=vmem, size = 0x400, scoped, tag = 'output window, operand 1, single buffered']
    #allocation4 [shape = 's32[1]{0}', space=sflag, size = 0x4, scoped, tag = 'scoped memory for tpu_custom_call.1']
    %9 = vsyncpa [#allocation4], 0
    // Predicated region
    $region2: #{tpu_custom_call.1} parent=1 // pred_check
      _
    $region3: #{tpu_custom_call.1} parent=1 // pred_check_branch
      %11 = sbr.rel (0) target = $region5
    $region4: #{tpu_custom_call.1} parent=1 // pred_region
      _
    $region5: #{tpu_custom_call.1} parent=1 // pred_fallthru
      _
    // Predicated region
    $region6: #{tpu_custom_call.1} parent=1 // pred_check
      _
    $region7: #{tpu_custom_call.1} parent=1 // pred_check_branch
      %13 = sbr.rel (0) target = $region9
    $region8: #{tpu_custom_call.1} parent=1 // pred_region
      _
    $region9: #{tpu_custom_call.1} parent=1 // pred_fallthru
      _
    %p15 = scmp.eq.s32.totalorder 0, 0
    // Predicated region
    $region10: #{tpu_custom_call.1} parent=1 // pred_check
      %p16 = pneg %p15
    $region11: #{tpu_custom_call.1} parent=1 // pred_check_branch
      %18 = sbr.rel (%p16) target = $region13
    $region12: #{tpu_custom_call.1} parent=1 // pred_region
      %vm19 = vcmask 523264
      %20 = vst.msk [vmem:[#allocation2] sm:$0xff] %vm19, 0.0
      %21 = vst.msk [vmem:[#allocation2 + $0x8] sm:$0xff] %vm19, 0.0
      %22 = vst.msk [vmem:[#allocation2 + $0x10] sm:$0xff] %vm19, 0.0
      %23 = vst.msk [vmem:[#allocation2 + $0x18] sm:$0xff] %vm19, 0.0
      %24 = vst.msk [vmem:[#allocation2 + $0x20] sm:$0xff] %vm19, 0.0
      %25 = vst.msk [vmem:[#allocation2 + $0x28] sm:$0xff] %vm19, 0.0
      %26 = vst.msk [vmem:[#allocation2 + $0x30] sm:$0xff] %vm19, 0.0
      %27 = vst.msk [vmem:[#allocation2 + $0x38] sm:$0xff] %vm19, 0.0
      %28 = vst.msk [vmem:[#allocation2 + $0x40] sm:$0xff] %vm19, 0.0
      %29 = vst.msk [vmem:[#allocation2 + $0x48] sm:$0xff] %vm19, 0.0
      %30 = vst.msk [vmem:[#allocation2 + $0x50] sm:$0xff] %vm19, 0.0
      %31 = vst.msk [vmem:[#allocation2 + $0x58] sm:$0xff] %vm19, 0.0
      %32 = vst.msk [vmem:[#allocation2 + $0x60] sm:$0xff] %vm19, 0.0
      %33 = vst.msk [vmem:[#allocation2 + $0x68] sm:$0xff] %vm19, 0.0
      %34 = vst.msk [vmem:[#allocation2 + $0x70] sm:$0xff] %vm19, 0.0
      %35 = vst.msk [vmem:[#allocation2 + $0x78] sm:$0xff] %vm19, 0.0
    $region13: #{tpu_custom_call.1} parent=1 // pred_fallthru
      _
    %v36 = vld [vmem:[#allocation2] sm:$0xff]
    %v37 = vld [vmem:[#allocation2 + $0x8] sm:$0xff]
    %v38 = vld [vmem:[#allocation2 + $0x10] sm:$0xff]
    %v39 = vld [vmem:[#allocation2 + $0x18] sm:$0xff]
    %v40 = vld [vmem:[#allocation2 + $0x20] sm:$0xff]
    %v41 = vld [vmem:[#allocation2 + $0x28] sm:$0xff]
    %v42 = vld [vmem:[#allocation2 + $0x30] sm:$0xff]
    %v43 = vld [vmem:[#allocation2 + $0x38] sm:$0xff]
    %v44 = vld [vmem:[#allocation2 + $0x40] sm:$0xff]
    %v45 = vld [vmem:[#allocation2 + $0x48] sm:$0xff]
    %v46 = vld [vmem:[#allocation2 + $0x50] sm:$0xff]
    %v47 = vld [vmem:[#allocation2 + $0x58] sm:$0xff]
    %v48 = vld [vmem:[#allocation2 + $0x60] sm:$0xff]
    %v49 = vld [vmem:[#allocation2 + $0x68] sm:$0xff]
    %v50 = vld [vmem:[#allocation2 + $0x70] sm:$0xff]
    %v51 = vld [vmem:[#allocation2 + $0x78] sm:$0xff]
    %v52 = vld [vmem:[%s0] sm:$0xff]
    %v53 = vld [vmem:[%s0 + $0x8] sm:$0xf]
    %v54 = vld [vmem:[%s0 + $0xc] sm:$0xff]
    %v55 = vld [vmem:[%s0 + $0x14] sm:$0xf]
    %v56 = vld [vmem:[%s0 + $0x18] sm:$0xff]
    %v57 = vld [vmem:[%s0 + $0x20] sm:$0xf]
    %v58 = vld [vmem:[%s0 + $0x24] sm:$0xff]
    %v59 = vld [vmem:[%s0 + $0x2c] sm:$0xf]
    %v60 = vld [vmem:[%s0 + $0x30] sm:$0xff]
    %v61 = vld [vmem:[%s0 + $0x38] sm:$0xf]
    %v62 = vld [vmem:[%s0 + $0x3c] sm:$0xff]
    %v63 = vld [vmem:[%s0 + $0x44] sm:$0xf]
    %v64 = vld [vmem:[%s0 + $0x48] sm:$0xff]
    %v65 = vld [vmem:[%s0 + $0x50] sm:$0xf]
    %v66 = vld [vmem:[%s0 + $0x54] sm:$0xff]
    %v67 = vld [vmem:[%s0 + $0x5c] sm:$0xf]
    %v68 = vld [vmem:[%s0 + $0x60] sm:$0xff]
    %v69 = vld [vmem:[%s0 + $0x68] sm:$0xf]
    %v70 = vld [vmem:[%s0 + $0x6c] sm:$0xff]
    %v71 = vld [vmem:[%s0 + $0x74] sm:$0xf]
    %v72 = vld [vmem:[%s0 + $0x78] sm:$0xff]
    %v73 = vld [vmem:[%s0 + $0x80] sm:$0xf]
    %v74 = vld [vmem:[%s0 + $0x84] sm:$0xff]
    %v75 = vld [vmem:[%s0 + $0x8c] sm:$0xf]
    %v76 = vld [vmem:[%s0 + $0x90] sm:$0xff]
    %v77 = vld [vmem:[%s0 + $0x98] sm:$0xf]
    %v78 = vld [vmem:[%s0 + $0x9c] sm:$0xff]
    %v79 = vld [vmem:[%s0 + $0xa4] sm:$0xf]
    %v80 = vld [vmem:[%s0 + $0xa8] sm:$0xff]
    %v81 = vld [vmem:[%s0 + $0xb0] sm:$0xf]
    %v82 = vld [vmem:[%s0 + $0xb4] sm:$0xff]
    %v83 = vld [vmem:[%s0 + $0xbc] sm:$0xf]
    %v84 = vld [vmem:[%s1] sm:$0xf]
    %v85 = vld [vmem:[%s1 + $0x4] sm:$0xf]
    %v86 = vld [vmem:[%s1 + $0x8] sm:$0xf]
    %v87 = vld [vmem:[%s1 + $0xc] sm:$0xf]
    %v88 = vld [vmem:[%s1 + $0x10] sm:$0xf]
    %v89 = vld [vmem:[%s1 + $0x14] sm:$0xf]
    %v90 = vld [vmem:[%s1 + $0x18] sm:$0xf]
    %v91 = vld [vmem:[%s1 + $0x1c] sm:$0xf]
    %v92 = vld [vmem:[%s1 + $0x20] sm:$0xf]
    %v93 = vld [vmem:[%s1 + $0x24] sm:$0xf]
    %v94 = vld [vmem:[%s1 + $0x28] sm:$0xf]
    %v95 = vld [vmem:[%s1 + $0x2c] sm:$0xf]
    %v96 = vld [vmem:[%s1 + $0x30] sm:$0xf]
    %v97 = vld [vmem:[%s1 + $0x34] sm:$0xf]
    %v98 = vld [vmem:[%s1 + $0x38] sm:$0xf]
    %v99 = vld [vmem:[%s1 + $0x3c] sm:$0xf]
    %v100 = vld [vmem:[%s1 + $0x40] sm:$0xf]
    %v101 = vld [vmem:[%s1 + $0x44] sm:$0xf]
    %v102 = vld [vmem:[%s1 + $0x48] sm:$0xf]
    %v103 = vld [vmem:[%s1 + $0x4c] sm:$0xf]
    %v104 = vld [vmem:[%s1 + $0x50] sm:$0xf]
    %v105 = vld [vmem:[%s1 + $0x54] sm:$0xf]
    %v106 = vld [vmem:[%s1 + $0x58] sm:$0xf]
    %v107 = vld [vmem:[%s1 + $0x5c] sm:$0xf]
    %v108 = vld [vmem:[%s1 + $0x60] sm:$0xf]
    %v109 = vld [vmem:[%s1 + $0x64] sm:$0xf]
    %v110 = vld [vmem:[%s1 + $0x68] sm:$0xf]
    %v111 = vld [vmem:[%s1 + $0x6c] sm:$0xf]
    %v112 = vld [vmem:[%s1 + $0x70] sm:$0xf]
    %v113 = vld [vmem:[%s1 + $0x74] sm:$0xf]
    %v114 = vld [vmem:[%s1 + $0x78] sm:$0xf]
    %v115 = vld [vmem:[%s1 + $0x7c] sm:$0xf]
    %v116 = vld [vmem:[%s1 + $0x80] sm:$0xf]
    %v117 = vld [vmem:[%s1 + $0x84] sm:$0xf]
    %v118 = vld [vmem:[%s1 + $0x88] sm:$0xf]
    %v119 = vld [vmem:[%s1 + $0x8c] sm:$0xf]
    %v120 = vld [vmem:[%s1 + $0x90] sm:$0xf]
    %v121 = vld [vmem:[%s1 + $0x94] sm:$0xf]
    %v122 = vld [vmem:[%s1 + $0x98] sm:$0xf]
    %v123 = vld [vmem:[%s1 + $0x9c] sm:$0xf]
    %v124 = vld [vmem:[%s1 + $0xa0] sm:$0xf]
    %v125 = vld [vmem:[%s1 + $0xa4] sm:$0xf]
    %v126 = vld [vmem:[%s1 + $0xa8] sm:$0xf]
    %v159 = vunpack.c.l.b16 %v52
    %v160 = vunpack.c.h.b16 %v52
    %v161 = vunpack.c.l.b16 %v53
    %v162 = vunpack.c.l.b16 %v54
    %v163 = vunpack.c.h.b16 %v54
    %v164 = vunpack.c.l.b16 %v55
    %v165 = vunpack.c.l.b16 %v56
    %v166 = vunpack.c.h.b16 %v56
    %v167 = vunpack.c.l.b16 %v57
    %v168 = vunpack.c.l.b16 %v58
    %v169 = vunpack.c.h.b16 %v58
    %v170 = vunpack.c.l.b16 %v59
    %v171 = vunpack.c.l.b16 %v60
    %v172 = vunpack.c.h.b16 %v60
    %v173 = vunpack.c.l.b16 %v61
    %v174 = vunpack.c.l.b16 %v62
    %v175 = vunpack.c.h.b16 %v62
    %v176 = vunpack.c.l.b16 %v63
    %v177 = vunpack.c.l.b16 %v64
    %v178 = vunpack.c.h.b16 %v64
    %v179 = vunpack.c.l.b16 %v65
    %v180 = vunpack.c.l.b16 %v66
    %v181 = vunpack.c.h.b16 %v66
    %v182 = vunpack.c.l.b16 %v67
    %v183 = vunpack.c.l.b16 %v68
    %v184 = vunpack.c.h.b16 %v68
    %v185 = vunpack.c.l.b16 %v69
    %v186 = vunpack.c.l.b16 %v70
    %v187 = vunpack.c.h.b16 %v70
    %v188 = vunpack.c.l.b16 %v71
    %v189 = vunpack.c.l.b16 %v72
    %v190 = vunpack.c.h.b16 %v72
    %v191 = vunpack.c.l.b16 %v73
    %v192 = vunpack.c.l.b16 %v74
    %v193 = vunpack.c.h.b16 %v74
    %v194 = vunpack.c.l.b16 %v75
    %v195 = vunpack.c.l.b16 %v76
    %v196 = vunpack.c.h.b16 %v76
    %v197 = vunpack.c.l.b16 %v77
    %v198 = vunpack.c.l.b16 %v78
    %v199 = vunpack.c.h.b16 %v78
    %v200 = vunpack.c.l.b16 %v79
    %v201 = vunpack.c.l.b16 %v80
    %v202 = vunpack.c.h.b16 %v80
    %v203 = vunpack.c.l.b16 %v81
    %v204 = vunpack.c.l.b16 %v82
    %v205 = vunpack.c.h.b16 %v82
    %v206 = vunpack.c.l.b16 %v83
    %v207 = vpack.c.b16 %v162, %v159
    %v208 = vpack.c.b16 %v163, %v160
    %v209 = vpack.c.b16 %v164, %v161
    %v210 = vpack.c.b16 %v168, %v165
    %v211 = vpack.c.b16 %v169, %v166
    %v212 = vpack.c.b16 %v170, %v167
    %v213 = vpack.c.b16 %v174, %v171
    %v214 = vpack.c.b16 %v175, %v172
    %v215 = vpack.c.b16 %v176, %v173
    %v216 = vpack.c.b16 %v180, %v177
    %v217 = vpack.c.b16 %v181, %v178
    %v218 = vpack.c.b16 %v182, %v179
    %v219 = vpack.c.b16 %v186, %v183
    %v220 = vpack.c.b16 %v187, %v184
    %v221 = vpack.c.b16 %v188, %v185
    %v222 = vpack.c.b16 %v192, %v189
    %v223 = vpack.c.b16 %v193, %v190
    %v224 = vpack.c.b16 %v194, %v191
    %v225 = vpack.c.b16 %v198, %v195
    %v226 = vpack.c.b16 %v199, %v196
    %v227 = vpack.c.b16 %v200, %v197
    %v228 = vpack.c.b16 %v204, %v201
    %v229 = vpack.c.b16 %v205, %v202
    %v230 = vpack.c.b16 %v206, %v203
    %v290 = vunpack.c.l.b16 %v84
    %v291 = vunpack.c.l.b16 %v85
    %v292 = vunpack.c.l.b16 %v86
    %v293 = vunpack.c.l.b16 %v87
    %v294 = vunpack.c.l.b16 %v88
    %v295 = vunpack.c.l.b16 %v89
    %v296 = vunpack.c.l.b16 %v90
    %v297 = vunpack.c.l.b16 %v91
    %v298 = vunpack.c.l.b16 %v92
    %v299 = vunpack.c.l.b16 %v93
    %v300 = vunpack.c.l.b16 %v94
    %v301 = vunpack.c.l.b16 %v95
    %v302 = vunpack.c.l.b16 %v96
    %v303 = vunpack.c.l.b16 %v97
    %v304 = vunpack.c.l.b16 %v98
    %v305 = vunpack.c.l.b16 %v99
    %v306 = vunpack.c.l.b16 %v100
    %v307 = vunpack.c.l.b16 %v101
    %v308 = vunpack.c.l.b16 %v102
    %v309 = vunpack.c.l.b16 %v103
    %v310 = vunpack.c.l.b16 %v104
    %v311 = vunpack.c.l.b16 %v105
    %v312 = vunpack.c.l.b16 %v106
    %v313 = vunpack.c.l.b16 %v107
    %v314 = vunpack.c.l.b16 %v108
    %v315 = vunpack.c.l.b16 %v109
    %v316 = vunpack.c.l.b16 %v110
    %v317 = vunpack.c.l.b16 %v111
    %v318 = vunpack.c.l.b16 %v112
    %v319 = vunpack.c.l.b16 %v113
    %v320 = vunpack.c.l.b16 %v114
    %v321 = vunpack.c.l.b16 %v115
    %v322 = vunpack.c.l.b16 %v116
    %v323 = vunpack.c.l.b16 %v117
    %v324 = vunpack.c.l.b16 %v118
    %v325 = vunpack.c.l.b16 %v119
    %v326 = vunpack.c.l.b16 %v120
    %v327 = vunpack.c.l.b16 %v121
    %v328 = vunpack.c.l.b16 %v122
    %v329 = vunpack.c.l.b16 %v123
    %v330 = vunpack.c.l.b16 %v124
    %v331 = vunpack.c.l.b16 %v125
    %v332 = vunpack.c.l.b16 %v126
    %v333 = vpack.c.b16 %v291, %v290
    %v334 = vpack.c.b16 %v293, %v292
    %v335 = vpack.c.b16 %v295, %v294
    %v336 = vpack.c.b16 %v297, %v296
    %v337 = vpack.c.b16 %v299, %v298
    %v338 = vpack.c.b16 %v301, %v300
    %v339 = vpack.c.b16 %v303, %v302
    %v340 = vpack.c.b16 %v305, %v304
    %v341 = vpack.c.b16 %v307, %v306
    %v342 = vpack.c.b16 %v309, %v308
    %v343 = vpack.c.b16 %v311, %v310
    %v344 = vpack.c.b16 %v313, %v312
    %v345 = vpack.c.b16 %v315, %v314
    %v346 = vpack.c.b16 %v317, %v316
    %v347 = vpack.c.b16 %v319, %v318
    %v348 = vpack.c.b16 %v321, %v320
    %v349 = vpack.c.b16 %v323, %v322
    %v350 = vpack.c.b16 %v325, %v324
    %v351 = vpack.c.b16 %v327, %v326
    %v352 = vpack.c.b16 %v329, %v328
    %v353 = vpack.c.b16 %v331, %v330
    %v354 = vpack.c.b16 %v332, %v332
    %vm376 = vcmask 711680
    %v378 = vsel %vm376, %v209, 0
    %v381 = vsel %vm376, %v212, 0
    %v384 = vsel %vm376, %v215, 0
    %v387 = vsel %vm376, %v218, 0
    %v390 = vsel %vm376, %v221, 0
    %v393 = vsel %vm376, %v224, 0
    %v396 = vsel %vm376, %v227, 0
    %v399 = vsel %vm376, %v230, 0
    %vm401 = vcmask 1042432
    %vm402 = vcmask 1043456
    %v403 = vsel %vm401, 4294967295, 65535
    %v404 = vsel %vm402, %v403, 0
    %v406 = vand.u32 %v354, %v404
    %408 = vmatprep.subr.bf16.mxu0 0
    %409 = vmatpush1.bf16.msra.mxu0 %v333
    %410 = vmatprep.subr.bf16.mxu0 0
    %411 = vmatpush1.bf16.msra.mxu0 %v334
    %412 = vmatprep.subr.bf16.mxu0 0
    %413 = vmatpush1.bf16.msra.mxu0 %v335
    %414 = vmatprep.subr.bf16.mxu0 0
    %415 = vmatpush1.bf16.msra.mxu0 %v336
    %416 = vmatprep.subr.bf16.mxu0 0
    %417 = vmatpush1.bf16.msra.mxu0 %v337
    %418 = vmatprep.subr.bf16.mxu0 0
    %419 = vmatpush1.bf16.msra.mxu0 %v338
    %420 = vmatprep.subr.bf16.mxu0 0
    %421 = vmatpush1.bf16.msra.mxu0 %v339
    %422 = vmatprep.subr.bf16.mxu0 0
    %423 = vmatpush1.bf16.msra.mxu0 %v340
    %424 = vmatprep.subr.bf16.mxu0 0
    %425 = vmatpush1.bf16.msra.mxu0 %v341
    %426 = vmatprep.subr.bf16.mxu0 0
    %427 = vmatpush1.bf16.msra.mxu0 %v342
    %428 = vmatprep.subr.bf16.mxu0 0
    %429 = vmatpush1.bf16.msra.mxu0 %v343
    %430 = vmatprep.subr.bf16.mxu0 0
    %431 = vmatpush1.bf16.msra.mxu0 %v344
    %432 = vmatprep.subr.bf16.mxu0 0
    %433 = vmatpush1.bf16.msra.mxu0 %v345
    %434 = vmatprep.subr.bf16.mxu0 0
    %435 = vmatpush1.bf16.msra.mxu0 %v346
    %436 = vmatprep.subr.bf16.mxu0 0
    %437 = vmatpush1.bf16.msra.mxu0 %v347
    %438 = vmatprep.subr.bf16.mxu0 0
    %439 = vmatpush1.bf16.msra.mxu0 %v348
    %440 = vmatprep.mubr.bf16.mxu0 %v208
    %441 = vmatmul.mubr.bf16.gmra.mrb[0].mxu0 %v207
    %v442 = vpop.f32.mrb[0].mxu0
    %v443 = vadd.f32 0.0, %v442
    %v444 = vpop.f32.mrb[0].mxu0
    %v445 = vpop.f32.mrb[0].mxu0
    %v446 = vadd.f32 0.0, %v445
    %v447 = vpop.f32.mrb[0].mxu0
    %448 = vmatprep.mubr.bf16.mxu0 %v211
    %449 = vmatmul.mubr.bf16.gmra.mrb[0].mxu0 %v210
    %v450 = vpop.f32.mrb[0].mxu0
    %v451 = vadd.f32 0.0, %v450
    %v452 = vpop.f32.mrb[0].mxu0
    %v453 = vpop.f32.mrb[0].mxu0
    %v454 = vadd.f32 0.0, %v453
    %v455 = vpop.f32.mrb[0].mxu0
    %456 = vmatprep.mubr.bf16.mxu0 %v214
    %457 = vmatmul.mubr.bf16.gmra.mrb[0].mxu0 %v213
    %v458 = vpop.f32.mrb[0].mxu0
    %v459 = vadd.f32 0.0, %v458
    %v460 = vpop.f32.mrb[0].mxu0
    %v461 = vpop.f32.mrb[0].mxu0
    %v462 = vadd.f32 0.0, %v461
    %v463 = vpop.f32.mrb[0].mxu0
    %464 = vmatprep.mubr.bf16.mxu0 %v217
    %465 = vmatmul.mubr.bf16.gmra.mrb[0].mxu0 %v216
    %v466 = vpop.f32.mrb[0].mxu0
    %v467 = vadd.f32 0.0, %v466
    %v468 = vpop.f32.mrb[0].mxu0
    %v469 = vpop.f32.mrb[0].mxu0
    %v470 = vadd.f32 0.0, %v469
    %v471 = vpop.f32.mrb[0].mxu0
    %472 = vmatprep.mubr.bf16.mxu0 %v220
    %473 = vmatmul.mubr.bf16.gmra.mrb[0].mxu0 %v219
    %v474 = vpop.f32.mrb[0].mxu0
    %v475 = vadd.f32 0.0, %v474
    %v476 = vpop.f32.mrb[0].mxu0
    %v477 = vpop.f32.mrb[0].mxu0
    %v478 = vadd.f32 0.0, %v477
    %v479 = vpop.f32.mrb[0].mxu0
    %480 = vmatprep.mubr.bf16.mxu0 %v223
    %481 = vmatmul.mubr.bf16.gmra.mrb[0].mxu0 %v222
    %v482 = vpop.f32.mrb[0].mxu0
    %v483 = vadd.f32 0.0, %v482
    %v484 = vpop.f32.mrb[0].mxu0
    %v485 = vpop.f32.mrb[0].mxu0
    %v486 = vadd.f32 0.0, %v485
    %v487 = vpop.f32.mrb[0].mxu0
    %488 = vmatprep.mubr.bf16.mxu0 %v226
    %489 = vmatmul.mubr.bf16.gmra.mrb[0].mxu0 %v225
    %v490 = vpop.f32.mrb[0].mxu0
    %v491 = vadd.f32 0.0, %v490
    %v492 = vpop.f32.mrb[0].mxu0
    %v493 = vpop.f32.mrb[0].mxu0
    %v494 = vadd.f32 0.0, %v493
    %v495 = vpop.f32.mrb[0].mxu0
    %496 = vmatprep.mubr.bf16.mxu0 %v229
    %497 = vmatmul.mubr.bf16.gmra.mrb[0].mxu0 %v228
    %v498 = vpop.f32.mrb[0].mxu0
    %v499 = vadd.f32 0.0, %v498
    %v500 = vpop.f32.mrb[0].mxu0
    %v501 = vpop.f32.mrb[0].mxu0
    %v502 = vadd.f32 0.0, %v501
    %v503 = vpop.f32.mrb[0].mxu0
    %504 = vdwg.mxu0
    %505 = vmatprep.subr.bf16.mxu0 0
    %506 = vmatpush1.bf16.msra.mxu0 %v349
    %507 = vmatprep.subr.bf16.mxu0 0
    %508 = vmatpush1.bf16.msra.mxu0 %v350
    %509 = vmatprep.subr.bf16.mxu0 0
    %510 = vmatpush1.bf16.msra.mxu0 %v351
    %511 = vmatprep.subr.bf16.mxu0 0
    %512 = vmatpush1.bf16.msra.mxu0 %v352
    %513 = vmatprep.subr.bf16.mxu0 0
    %514 = vmatpush1.bf16.msra.mxu0 %v353
    %515 = vmatprep.subr.bf16.mxu0 0
    %516 = vmatpush1.bf16.msra.mxu0 %v406
    %517 = vmatprep.subr.bf16.mxu0 0
    %518 = vmatpush1.bf16.msra.mxu0 0
    %519 = vmatprep.subr.bf16.mxu0 0
    %520 = vmatpush1.bf16.msra.mxu0 0
    %521 = vmatprep.subr.bf16.mxu0 0
    %522 = vmatpush1.bf16.msra.mxu0 0
    %523 = vmatprep.subr.bf16.mxu0 0
    %524 = vmatpush1.bf16.msra.mxu0 0
    %525 = vmatprep.subr.bf16.mxu0 0
    %526 = vmatpush1.bf16.msra.mxu0 0
    %527 = vmatprep.subr.bf16.mxu0 0
    %528 = vmatpush1.bf16.msra.mxu0 0
    %529 = vmatprep.subr.bf16.mxu0 0
    %530 = vmatpush1.bf16.msra.mxu0 0
    %531 = vmatprep.subr.bf16.mxu0 0
    %532 = vmatpush1.bf16.msra.mxu0 0
    %533 = vmatprep.subr.bf16.mxu0 0
    %534 = vmatpush1.bf16.msra.mxu0 0
    %535 = vmatprep.subr.bf16.mxu0 0
    %536 = vmatpush1.bf16.msra.mxu0 0
    %537 = vmatprep.mubr.bf16.mxu0 0
    %538 = vmatmul.mubr.bf16.gmra.mrb[0].mxu0 %v378
    %v539 = vpop.f32.mrb[0].mxu0
    %v540 = vadd.f32 %v443, %v539
    %v541 = vpop.f32.mrb[0].mxu0
    %v542 = vpop.f32.mrb[0].mxu0
    %v543 = vadd.f32 %v446, %v542
    %v544 = vpop.f32.mrb[0].mxu0
    %545 = vmatprep.mubr.bf16.mxu0 0
    %546 = vmatmul.mubr.bf16.gmra.mrb[0].mxu0 %v381
    %v547 = vpop.f32.mrb[0].mxu0
    %v548 = vadd.f32 %v451, %v547
    %v549 = vpop.f32.mrb[0].mxu0
    %v550 = vpop.f32.mrb[0].mxu0
    %v551 = vadd.f32 %v454, %v550
    %v552 = vpop.f32.mrb[0].mxu0
    %553 = vmatprep.mubr.bf16.mxu0 0
    %554 = vmatmul.mubr.bf16.gmra.mrb[0].mxu0 %v384
    %v555 = vpop.f32.mrb[0].mxu0
    %v556 = vadd.f32 %v459, %v555
    %v557 = vpop.f32.mrb[0].mxu0
    %v558 = vpop.f32.mrb[0].mxu0
    %v559 = vadd.f32 %v462, %v558
    %v560 = vpop.f32.mrb[0].mxu0
    %561 = vmatprep.mubr.bf16.mxu0 0
    %562 = vmatmul.mubr.bf16.gmra.mrb[0].mxu0 %v387
    %v563 = vpop.f32.mrb[0].mxu0
    %v564 = vadd.f32 %v467, %v563
    %v565 = vpop.f32.mrb[0].mxu0
    %v566 = vpop.f32.mrb[0].mxu0
    %v567 = vadd.f32 %v470, %v566
    %v568 = vpop.f32.mrb[0].mxu0
    %569 = vmatprep.mubr.bf16.mxu0 0
    %570 = vmatmul.mubr.bf16.gmra.mrb[0].mxu0 %v390
    %v571 = vpop.f32.mrb[0].mxu0
    %v572 = vadd.f32 %v475, %v571
    %v573 = vpop.f32.mrb[0].mxu0
    %v574 = vpop.f32.mrb[0].mxu0
    %v575 = vadd.f32 %v478, %v574
    %v576 = vpop.f32.mrb[0].mxu0
    %577 = vmatprep.mubr.bf16.mxu0 0
    %578 = vmatmul.mubr.bf16.gmra.mrb[0].mxu0 %v393
    %v579 = vpop.f32.mrb[0].mxu0
    %v580 = vadd.f32 %v483, %v579
    %v581 = vpop.f32.mrb[0].mxu0
    %v582 = vpop.f32.mrb[0].mxu0
    %v583 = vadd.f32 %v486, %v582
    %v584 = vpop.f32.mrb[0].mxu0
    %585 = vmatprep.mubr.bf16.mxu0 0
    %586 = vmatmul.mubr.bf16.gmra.mrb[0].mxu0 %v396
    %v587 = vpop.f32.mrb[0].mxu0
    %v588 = vadd.f32 %v491, %v587
    %v589 = vpop.f32.mrb[0].mxu0
    %v590 = vpop.f32.mrb[0].mxu0
    %v591 = vadd.f32 %v494, %v590
    %v592 = vpop.f32.mrb[0].mxu0
    %593 = vmatprep.mubr.bf16.mxu0 0
    %594 = vmatmul.mubr.bf16.gmra.mrb[0].mxu0 %v399
    %v595 = vpop.f32.mrb[0].mxu0
    %v596 = vadd.f32 %v499, %v595
    %v597 = vpop.f32.mrb[0].mxu0
    %v598 = vpop.f32.mrb[0].mxu0
    %v599 = vadd.f32 %v502, %v598
    %v600 = vpop.f32.mrb[0].mxu0
    %601 = vdwg.mxu0
    %v602 = vadd.f32 %v36, %v540
    %v603 = vadd.f32 %v37, %v543
    %v604 = vadd.f32 %v38, %v548
    %v605 = vadd.f32 %v39, %v551
    %v606 = vadd.f32 %v40, %v556
    %v607 = vadd.f32 %v41, %v559
    %v608 = vadd.f32 %v42, %v564
    %v609 = vadd.f32 %v43, %v567
    %v610 = vadd.f32 %v44, %v572
    %v611 = vadd.f32 %v45, %v575
    %v612 = vadd.f32 %v46, %v580
    %v613 = vadd.f32 %v47, %v583
    %v614 = vadd.f32 %v48, %v588
    %v615 = vadd.f32 %v49, %v591
    %v616 = vadd.f32 %v50, %v596
    %v617 = vadd.f32 %v51, %v599
    %vm618 = vcmask 523264
    %619 = vst.msk [vmem:[#allocation2] sm:$0xff] %vm618, %v602
    %620 = vst.msk [vmem:[#allocation2 + $0x8] sm:$0xff] %vm618, %v603
    %621 = vst.msk [vmem:[#allocation2 + $0x10] sm:$0xff] %vm618, %v604
    %622 = vst.msk [vmem:[#allocation2 + $0x18] sm:$0xff] %vm618, %v605
    %623 = vst.msk [vmem:[#allocation2 + $0x20] sm:$0xff] %vm618, %v606
    %624 = vst.msk [vmem:[#allocation2 + $0x28] sm:$0xff] %vm618, %v607
    %625 = vst.msk [vmem:[#allocation2 + $0x30] sm:$0xff] %vm618, %v608
    %626 = vst.msk [vmem:[#allocation2 + $0x38] sm:$0xff] %vm618, %v609
    %627 = vst.msk [vmem:[#allocation2 + $0x40] sm:$0xff] %vm618, %v610
    %628 = vst.msk [vmem:[#allocation2 + $0x48] sm:$0xff] %vm618, %v611
    %629 = vst.msk [vmem:[#allocation2 + $0x50] sm:$0xff] %vm618, %v612
    %630 = vst.msk [vmem:[#allocation2 + $0x58] sm:$0xff] %vm618, %v613
    %631 = vst.msk [vmem:[#allocation2 + $0x60] sm:$0xff] %vm618, %v614
    %632 = vst.msk [vmem:[#allocation2 + $0x68] sm:$0xff] %vm618, %v615
    %633 = vst.msk [vmem:[#allocation2 + $0x70] sm:$0xff] %vm618, %v616
    %634 = vst.msk [vmem:[#allocation2 + $0x78] sm:$0xff] %vm618, %v617
    // Predicated region
    $region14: #{tpu_custom_call.1} parent=1 // pred_check
      %p635 = pneg %p15
    $region15: #{tpu_custom_call.1} parent=1 // pred_check_branch
      %637 = sbr.rel (%p635) target = $region17
    $region16: #{tpu_custom_call.1} parent=1 // pred_region
      %v638 = vld [vmem:[#allocation2] sm:$0xff]
      %v639 = vld [vmem:[#allocation2 + $0x8] sm:$0xff]
      %v640 = vld [vmem:[#allocation2 + $0x10] sm:$0xff]
      %v641 = vld [vmem:[#allocation2 + $0x18] sm:$0xff]
      %v642 = vld [vmem:[#allocation2 + $0x20] sm:$0xff]
      %v643 = vld [vmem:[#allocation2 + $0x28] sm:$0xff]
      %v644 = vld [vmem:[#allocation2 + $0x30] sm:$0xff]
      %v645 = vld [vmem:[#allocation2 + $0x38] sm:$0xff]
      %v646 = vld [vmem:[#allocation2 + $0x40] sm:$0xff]
      %v647 = vld [vmem:[#allocation2 + $0x48] sm:$0xff]
      %v648 = vld [vmem:[#allocation2 + $0x50] sm:$0xff]
      %v649 = vld [vmem:[#allocation2 + $0x58] sm:$0xff]
      %v650 = vld [vmem:[#allocation2 + $0x60] sm:$0xff]
      %v651 = vld [vmem:[#allocation2 + $0x68] sm:$0xff]
      %v652 = vld [vmem:[#allocation2 + $0x70] sm:$0xff]
      %v653 = vld [vmem:[#allocation2 + $0x78] sm:$0xff]
      %v654 = vpack.c.bf16 %v639, %v638
      %v655 = vpack.c.bf16 %v641, %v640
      %v656 = vpack.c.bf16 %v643, %v642
      %v657 = vpack.c.bf16 %v645, %v644
      %v658 = vpack.c.bf16 %v647, %v646
      %v659 = vpack.c.bf16 %v649, %v648
      %v660 = vpack.c.bf16 %v651, %v650
      %v661 = vpack.c.bf16 %v653, %v652
      %v670 = vunpack.c.l.b16 %v654
      %v671 = vunpack.c.h.b16 %v654
      %v672 = vunpack.c.l.b16 %v655
      %v673 = vunpack.c.h.b16 %v655
      %v674 = vunpack.c.l.b16 %v656
      %v675 = vunpack.c.h.b16 %v656
      %v676 = vunpack.c.l.b16 %v657
      %v677 = vunpack.c.h.b16 %v657
      %v678 = vunpack.c.l.b16 %v658
      %v679 = vunpack.c.h.b16 %v658
      %v680 = vunpack.c.l.b16 %v659
      %v681 = vunpack.c.h.b16 %v659
      %v682 = vunpack.c.l.b16 %v660
      %v683 = vunpack.c.h.b16 %v660
      %v684 = vunpack.c.l.b16 %v661
      %v685 = vunpack.c.h.b16 %v661
      %v686 = vpack.c.b16 %v670, %v670
      %v687 = vpack.c.b16 %v671, %v671
      %v688 = vpack.c.b16 %v672, %v672
      %v689 = vpack.c.b16 %v673, %v673
      %v690 = vpack.c.b16 %v674, %v674
      %v691 = vpack.c.b16 %v675, %v675
      %v692 = vpack.c.b16 %v676, %v676
      %v693 = vpack.c.b16 %v677, %v677
      %v694 = vpack.c.b16 %v678, %v678
      %v695 = vpack.c.b16 %v679, %v679
      %v696 = vpack.c.b16 %v680, %v680
      %v697 = vpack.c.b16 %v681, %v681
      %v698 = vpack.c.b16 %v682, %v682
      %v699 = vpack.c.b16 %v683, %v683
      %v700 = vpack.c.b16 %v684, %v684
      %v701 = vpack.c.b16 %v685, %v685
      %vm718 = vcmask 519168
      %719 = vst.msk [vmem:[%s2] sm:$0xf] %vm718, %v686
      %720 = vst.msk [vmem:[%s2 + $0x4] sm:$0xf] %vm718, %v687
      %721 = vst.msk [vmem:[%s2 + $0x8] sm:$0xf] %vm718, %v688
      %722 = vst.msk [vmem:[%s2 + $0xc] sm:$0xf] %vm718, %v689
      %723 = vst.msk [vmem:[%s2 + $0x10] sm:$0xf] %vm718, %v690
      %724 = vst.msk [vmem:[%s2 + $0x14] sm:$0xf] %vm718, %v691
      %725 = vst.msk [vmem:[%s2 + $0x18] sm:$0xf] %vm718, %v692
      %726 = vst.msk [vmem:[%s2 + $0x1c] sm:$0xf] %vm718, %v693
      %727 = vst.msk [vmem:[%s2 + $0x20] sm:$0xf] %vm718, %v694
      %728 = vst.msk [vmem:[%s2 + $0x24] sm:$0xf] %vm718, %v695
      %729 = vst.msk [vmem:[%s2 + $0x28] sm:$0xf] %vm718, %v696
      %730 = vst.msk [vmem:[%s2 + $0x2c] sm:$0xf] %vm718, %v697
      %731 = vst.msk [vmem:[%s2 + $0x30] sm:$0xf] %vm718, %v698
      %732 = vst.msk [vmem:[%s2 + $0x34] sm:$0xf] %vm718, %v699
      %733 = vst.msk [vmem:[%s2 + $0x38] sm:$0xf] %vm718, %v700
      %734 = vst.msk [vmem:[%s2 + $0x3c] sm:$0xf] %vm718, %v701
      %v735 = vsel %vm618, %v638, 0.0
      %v736 = vsel %vm618, %v639, 0.0
      %v737 = vadd.f32 %v735, %v736
      %v738 = vsel %vm618, %v640, 0.0
      %v739 = vadd.f32 %v737, %v738
      %v740 = vsel %vm618, %v641, 0.0
      %v741 = vadd.f32 %v739, %v740
      %v742 = vsel %vm618, %v642, 0.0
      %v743 = vadd.f32 %v741, %v742
      %v744 = vsel %vm618, %v643, 0.0
      %v745 = vadd.f32 %v743, %v744
      %v746 = vsel %vm618, %v644, 0.0
      %v747 = vadd.f32 %v745, %v746
      %v748 = vsel %vm618, %v645, 0.0
      %v749 = vadd.f32 %v747, %v748
      %v750 = vsel %vm618, %v646, 0.0
      %v751 = vadd.f32 %v749, %v750
      %v752 = vsel %vm618, %v647, 0.0
      %v753 = vadd.f32 %v751, %v752
      %v754 = vsel %vm618, %v648, 0.0
      %v755 = vadd.f32 %v753, %v754
      %v756 = vsel %vm618, %v649, 0.0
      %v757 = vadd.f32 %v755, %v756
      %v758 = vsel %vm618, %v650, 0.0
      %v759 = vadd.f32 %v757, %v758
      %v760 = vsel %vm618, %v651, 0.0
      %v761 = vadd.f32 %v759, %v760
      %v762 = vsel %vm618, %v652, 0.0
      %v763 = vadd.f32 %v761, %v762
      %v764 = vsel %vm618, %v653, 0.0
      %v765 = vadd.f32 %v763, %v764
      %v766 = vrot.slane %v765, 4
      %v767 = vadd.f32 %v765, %v766
      %v768 = vrot.slane %v767, 2
      %v769 = vadd.f32 %v767, %v768
      %v770 = vrot.slane %v769, 1
      %v771 = vadd.f32 %v769, %v770
      %v772 = vmul.f32 %v638, %v638
      %v773 = vmul.f32 %v639, %v639
      %v774 = vmul.f32 %v640, %v640
      %v775 = vmul.f32 %v641, %v641
      %v776 = vmul.f32 %v642, %v642
      %v777 = vmul.f32 %v643, %v643
      %v778 = vmul.f32 %v644, %v644
      %v779 = vmul.f32 %v645, %v645
      %v780 = vmul.f32 %v646, %v646
      %v781 = vmul.f32 %v647, %v647
      %v782 = vmul.f32 %v648, %v648
      %v783 = vmul.f32 %v649, %v649
      %v784 = vmul.f32 %v650, %v650
      %v785 = vmul.f32 %v651, %v651
      %v786 = vmul.f32 %v652, %v652
      %v787 = vmul.f32 %v653, %v653
      %v788 = vsel %vm618, %v772, 0.0
      %v789 = vsel %vm618, %v773, 0.0
      %v790 = vadd.f32 %v788, %v789
      %v791 = vsel %vm618, %v774, 0.0
      %v792 = vadd.f32 %v790, %v791
      %v793 = vsel %vm618, %v775, 0.0
      %v794 = vadd.f32 %v792, %v793
      %v795 = vsel %vm618, %v776, 0.0
      %v796 = vadd.f32 %v794, %v795
      %v797 = vsel %vm618, %v777, 0.0
      %v798 = vadd.f32 %v796, %v797
      %v799 = vsel %vm618, %v778, 0.0
      %v800 = vadd.f32 %v798, %v799
      %v801 = vsel %vm618, %v779, 0.0
      %v802 = vadd.f32 %v800, %v801
      %v803 = vsel %vm618, %v780, 0.0
      %v804 = vadd.f32 %v802, %v803
      %v805 = vsel %vm618, %v781, 0.0
      %v806 = vadd.f32 %v804, %v805
      %v807 = vsel %vm618, %v782, 0.0
      %v808 = vadd.f32 %v806, %v807
      %v809 = vsel %vm618, %v783, 0.0
      %v810 = vadd.f32 %v808, %v809
      %v811 = vsel %vm618, %v784, 0.0
      %v812 = vadd.f32 %v810, %v811
      %v813 = vsel %vm618, %v785, 0.0
      %v814 = vadd.f32 %v812, %v813
      %v815 = vsel %vm618, %v786, 0.0
      %v816 = vadd.f32 %v814, %v815
      %v817 = vsel %vm618, %v787, 0.0
      %v818 = vadd.f32 %v816, %v817
      %v819 = vrot.slane %v818, 4
      %v820 = vadd.f32 %v818, %v819
      %v821 = vrot.slane %v820, 2
      %v822 = vadd.f32 %v820, %v821
      %v823 = vrot.slane %v822, 1
      %v824 = vadd.f32 %v822, %v823
      %vm825 = vcmask 1040384
      %v826 = vsel %vm825, %v771, %v824
      %vm827 = vcmask 517120
      %828 = vst.msk [vmem:[#allocation3] sm:$0x3] %vm827, %v826
    $region17: #{tpu_custom_call.1} parent=1 // pred_fallthru
      _
    // Predicated region
    $region18: #{tpu_custom_call.1} parent=1 // pred_check
      _
    $region19: #{tpu_custom_call.1} parent=1 // pred_check_branch
      %830 = sbr.rel (0) target = $region21
    $region20: #{tpu_custom_call.1} parent=1 // pred_region
      _
    $region21: #{tpu_custom_call.1} parent=1 // pred_fallthru
      _
    // Predicated region
    $region22: #{tpu_custom_call.1} parent=1 // pred_check
      _
    $region23: #{tpu_custom_call.1} parent=1 // pred_check_branch
      %832 = sbr.rel (0) target = $region25
    $region24: #{tpu_custom_call.1} parent=1 // pred_region
      %s834 = ssub.s32 32, 32
      %835 = vsyncadd [#allocation4], %s834
      %s837 = sshll.u32 [#allocation3], 4
      %s838 = int_to_ptr.vmem [resolvable:$true] %s837
      %840 = dma.vmem_to_hbm [thread:$0]  %s838, 32, %s3, [#allocation4]
    $region25: #{tpu_custom_call.1} parent=1 // pred_fallthru
      _
    // Predicated region
    $region26: #{tpu_custom_call.1} parent=1 // pred_check
      _
    $region27: #{tpu_custom_call.1} parent=1 // pred_check_branch
      %842 = sbr.rel (0) target = $region29
    $region28: #{tpu_custom_call.1} parent=1 // pred_region
      _
    $region29: #{tpu_custom_call.1} parent=1 // pred_fallthru
      _
    // Predicated region
    $region30: #{tpu_custom_call.1} parent=1 // pred_check
      _
    $region31: #{tpu_custom_call.1} parent=1 // pred_check_branch
      %844 = sbr.rel (0) target = $region33
    $region32: #{tpu_custom_call.1} parent=1 // pred_region
      %845 = dma.done [#allocation4], 32
    $region33: #{tpu_custom_call.1} parent=1 // pred_fallthru
      _
    %846 = vsyncpa [#allocation4], 1

</llo_original>
